<compile_context>
chip_gen: v7x
topology: tpu7x:2x2x1
jax: 0.10.0
libtpu: 0.0.40
codegen_flags: <defaults>
</compile_context>

<pallas_src>
import jax
import jax.numpy as jnp
from jax.experimental import pallas as pl
from jax.experimental.pallas import tpu as pltpu


# ~2 MiB per block: input + output double-buffered = 8 MiB of VMEM, which fits
# the default scoped-VMEM limit on every TPU generation (16/32/32 MiB) while
# being large enough to sit near the HBM roofline for a pure streaming copy.
_BLOCK_BYTES_TARGET = 2 * 1024 * 1024

# Candidate lane widths (multiples of 128), widest first.
_LANE_CANDIDATES = (32768, 16384, 8192, 4096, 2048, 1024, 512, 256, 128)


def _identity_kernel(x_ref, o_ref):
    # The "forward" of Identity is just returning the input.
    o_ref[...] = x_ref[...]


@jax.jit
def identity_pallas(x):
    """Identity forward pass: returns a tensor equal to `x` (same shape/dtype)."""
    orig_shape = x.shape
    n = x.size
    if n == 0:
        return x

    x_flat = x.reshape(-1)  # contiguous flatten: layout-only, no HBM copy
    itemsize = jnp.dtype(x.dtype).itemsize

    # Pick the widest lane count that exactly divides the element count so the
    # 2D fold needs no padding at all.
    lane = None
    for cand in _LANE_CANDIDATES:
        if n % cand == 0:
            lane = cand
            break

    if lane is None:
        # Tiny / awkward element counts (not a multiple of 128): a single
        # full-array block is always legal and needs no padding either.
        # TODO(synk): for very large tensors whose size is not a multiple of
        # 128, a tail-only padded second call would be preferable.
        x2 = x_flat.reshape(1, n)
        out = pl.pallas_call(
            _identity_kernel,
            out_shape=jax.ShapeDtypeStruct((1, n), x.dtype),
            grid=(1,),
            in_specs=[pl.BlockSpec((1, n), lambda i: (0, 0))],
            out_specs=pl.BlockSpec((1, n), lambda i: (0, 0)),
        )(x2)
        return out.reshape(orig_shape)

    rows = n // lane
    target_rows = max(1, (_BLOCK_BYTES_TARGET // itemsize) // lane)
    if target_rows >= rows:
        tr = rows                         # block == full dim: always legal
    else:
        tr = max(8, (target_rows // 8) * 8)  # keep (8, 128) tiling alignment

    x2 = x_flat.reshape(rows, lane)       # layout-only reshape, no copy
    grid = (pl.cdiv(rows, tr),)           # ragged last block is masked by Pallas

    out = pl.pallas_call(
        _identity_kernel,
        out_shape=jax.ShapeDtypeStruct((rows, lane), x.dtype),
        grid=grid,
        in_specs=[pl.BlockSpec((tr, lane), lambda i: (i, 0))],
        out_specs=pl.BlockSpec((tr, lane), lambda i: (i, 0)),
        compiler_params=pltpu.CompilerParams(
            dimension_semantics=("parallel",),  # shard row-blocks across TCs (v7x)
        ),
    )(x2)
    return out.reshape(orig_shape)


if __name__ == "__main__":
    key = jax.random.PRNGKey(0)
    x = jax.random.normal(key, (2, 4, 16, 16), dtype=jnp.float32)

    y = identity_pallas(x)
    jax.block_until_ready(y)

    assert y.shape == x.shape, (y.shape, x.shape)
    assert y.dtype == x.dtype, (y.dtype, x.dtype)
    assert bool(jnp.array_equal(y, x)), "identity output mismatch"

    print("KERNEL_OK")
</pallas_src>

<mosaic_0001>
module attributes {stable_mosaic.version = 11 : i64} {
  func.func @_identity_kernel(%arg0: i32, %arg1: memref<1x2048xf32, #tpu.memory_space<vmem>>, %arg2: memref<1x2048xf32, #tpu.memory_space<vmem>>) attributes {dimension_semantics = [#tpu.dimension_semantics<parallel>], iteration_bounds = array<i64: 1>, scalar_prefetch = 0 : i64, scratch_operands = 0 : i64, tpu.core_type = #tpu.core_type<tc>, window_params = [{transform_indices = @transform_0, window_bounds = array<i64: 1, 2048>}, {transform_indices = @transform_1, window_bounds = array<i64: 1, 2048>}]} {
    %c0 = arith.constant 0 : index
    %c0_0 = arith.constant 0 : index
    %0 = vector.load %arg1[%c0, %c0_0] : memref<1x2048xf32, #tpu.memory_space<vmem>>, vector<1x2048xf32>
    %c0_1 = arith.constant 0 : index
    %c0_2 = arith.constant 0 : index
    %1 = vector.load %arg2[%c0_1, %c0_2] : memref<1x2048xf32, #tpu.memory_space<vmem>>, vector<1x2048xf32>
    tpu.vector_store %arg2[%c0_1, %c0_2], %0 {strides = array<i32>} : memref<1x2048xf32, #tpu.memory_space<vmem>>, vector<1x2048xf32>,
    return
  }
  func.func @transform_0(%arg0: i32) -> (i32, i32) {
    %c0_i32 = arith.constant 0 : i32
    %c0_i32_0 = arith.constant 0 : i32
    return %arg0, %c0_i32 : i32, i32
  }
  func.func @transform_1(%arg0: i32) -> (i32, i32) {
    %c0_i32 = arith.constant 0 : i32
    %c0_i32_0 = arith.constant 0 : i32
    return %arg0, %c0_i32 : i32, i32
  }
}

</mosaic_0001>

<llo_original>
// kernel: identity_pallas.1
$region0: #{identity_pallas.1}
  #allocation0 [shape = 'u32[]', space=smem, size = 0x4, offset = 0x4, fixed_abs, tag = 'smem constant byte address 0x4 - core index']
  #allocation1 [shape = 'u32[144,128]{1,0:T(1,128)}', space=vmem, size = 0x12000, scoped, tag = 'internal scratch']
  %s0 = inlined_call_operand.vmem [shape: f32[1,2048], index: 0, kind: input, shape index: {}]
  %s1 = inlined_call_operand.vmem [shape: f32[1,2048], index: 1, kind: output, shape index: {}]
  %s2 = sld [smem:[#allocation0]]
  $region14: #{identity_pallas.1} parent=0
    _
  %s4 = ssub.s32 1, %s2
  %s5 = scalar_select 0, %s4, %s2
  // Predicated region
  $region2: #{identity_pallas.1} parent=0 // pred_check
    _
  $region3: #{identity_pallas.1} parent=0 // pred_check_branch
    %7 = sbr.rel (0) target = $region5
  $region4: #{identity_pallas.1} parent=0 // pred_region
    _
  $region5: #{identity_pallas.1} parent=0 // pred_fallthru
    _
  %v8 = vld [vmem:[%s0] sm:$0xff]
  %v9 = vld [vmem:[%s0 + $0x8] sm:$0xff]
  %10 = vst [vmem:[%s1] sm:$0xff] %v8
  %11 = vst [vmem:[%s1 + $0x8] sm:$0xff] %v9
  // Predicated region
  $region6: #{identity_pallas.1} parent=0 // pred_check
    _
  $region7: #{identity_pallas.1} parent=0 // pred_check_branch
    %13 = sbr.rel (0) target = $region9
  $region8: #{identity_pallas.1} parent=0 // pred_region
    _
  $region9: #{identity_pallas.1} parent=0 // pred_fallthru
    _
  // Predicated region
  $region10: #{identity_pallas.1} parent=0 // pred_check
    _
  $region11: #{identity_pallas.1} parent=0 // pred_check_branch
    %15 = sbr.rel (0) target = $region13
  $region12: #{identity_pallas.1} parent=0 // pred_region
    _
  $region13: #{identity_pallas.1} parent=0 // pred_fallthru
    _

</llo_original>
